<compile_context>
chip_gen: v7x
topology: tpu7x:2x2x1
jax: 0.10.0
libtpu: 0.0.40
codegen_flags: <defaults>
</compile_context>

<pallas_src>
import jax
import jax.numpy as jnp
from jax import lax
from jax.experimental import pallas as pl
from jax.experimental.pallas import tpu as pltpu


def attention_matrix_kernel(xq_ref, xk_ref, wqt_ref, bq_ref, wkt_ref, bk_ref,
                            o_ref, q_scr):
    # xq_ref : (1, TQ, H)  query-side x tile (compute dtype, e.g. bf16)
    # xk_ref : (1, TK, H)  key-side x tile   (compute dtype)
    # wqt/wkt: (H, H)      pre-transposed weights, layout (H_in, H_out)
    # bq/bk  : (1, H)      f32 biases
    # o_ref  : (1, TQ, TK) output tile
    # q_scr  : (TQ, H)     VMEM scratch caching the projected q tile
    j = pl.program_id(2)

    @pl.when(j == 0)
    def _():
        # Project the query tile once per (batch, query-tile); reused for all
        # key tiles. f32 accumulation + f32 bias epilogue, stored in bf16 so the
        # second matmul reads MXU-native operands without a per-step cast.
        q = jnp.dot(xq_ref[0], wqt_ref[...],
                    preferred_element_type=jnp.float32) + bq_ref[...]
        q_scr[...] = q.astype(q_scr.dtype)

    # Project the key tile for this step (f32 accumulate, f32 bias).
    k = jnp.dot(xk_ref[0], wkt_ref[...],
                preferred_element_type=jnp.float32) + bk_ref[...]

    # q @ k^T via contraction dims (no in-kernel transpose).
    s = lax.dot_general(
        q_scr[...], k.astype(q_scr.dtype),
        dimension_numbers=(((1,), (1,)), ((), ())),
        preferred_element_type=jnp.float32)
    o_ref[0] = s.astype(o_ref.dtype)


def attention_matrix(x, wq, bq, wk, bk, *, tq=256, tk=256,
                     compute_dtype=jnp.bfloat16):
    """q = x @ Wq^T + bq ; k = x @ Wk^T + bk ; return q @ k^T  (per batch)."""
    B, S, H = x.shape
    out_dtype = x.dtype
    tq = min(tq, S)
    tk = min(tk, S)
    n_q = pl.cdiv(S, tq)
    n_k = pl.cdiv(S, tk)

    # One-time weight prep in the wrapper (outside the kernel):
    #   - transpose PyTorch (out_features, in_features) -> (in, out)
    #   - cast matmul operands to the MXU-native compute dtype.
    x_c = x.astype(compute_dtype)
    wqt = wq.T.astype(compute_dtype)
    wkt = wk.T.astype(compute_dtype)
    bq2 = bq.reshape(1, H).astype(jnp.float32)
    bk2 = bk.reshape(1, H).astype(jnp.float32)

    itemsize = jnp.dtype(compute_dtype).itemsize
    flops = B * (2 * 2 * S * H * H + 2 * S * S * H)          # 2 projections + q@k^T
    bytes_accessed = (2 * B * S * H * itemsize                # x read twice (q & k tiles)
                      + 2 * H * H * itemsize                  # Wq^T, Wk^T
                      + 2 * H * 4                             # biases (f32)
                      + B * S * S * jnp.dtype(out_dtype).itemsize)  # output

    return pl.pallas_call(
        attention_matrix_kernel,
        out_shape=jax.ShapeDtypeStruct((B, S, S), out_dtype),
        grid=(B, n_q, n_k),
        in_specs=[
            pl.BlockSpec((1, tq, H), lambda b, i, j: (b, i, 0)),   # x query tile
            pl.BlockSpec((1, tk, H), lambda b, i, j: (b, j, 0)),   # x key tile
            pl.BlockSpec((H, H), lambda b, i, j: (0, 0)),          # Wq^T (resident)
            pl.BlockSpec((1, H), lambda b, i, j: (0, 0)),          # bq
            pl.BlockSpec((H, H), lambda b, i, j: (0, 0)),          # Wk^T (resident)
            pl.BlockSpec((1, H), lambda b, i, j: (0, 0)),          # bk
        ],
        out_specs=pl.BlockSpec((1, tq, tk), lambda b, i, j: (b, i, j)),
        scratch_shapes=[pltpu.VMEM((tq, H), compute_dtype)],
        compiler_params=pltpu.CompilerParams(
            dimension_semantics=("parallel", "parallel", "arbitrary")),
        cost_estimate=pl.CostEstimate(
            flops=flops, transcendentals=0, bytes_accessed=bytes_accessed),
    )(x_c, x_c, wqt, bq2, wkt, bk2)


def attention_matrix_ref(x, wq, bq, wk, bk):
    # Exact f32 semantics of the PyTorch module.
    q = jnp.einsum("bsh,oh->bso", x, wq) + bq
    k = jnp.einsum("bsh,oh->bso", x, wk) + bk
    return jnp.einsum("bso,bto->bst", q, k)


def attention_matrix_ref_matched(x, wq, bq, wk, bk, compute_dtype=jnp.bfloat16):
    # Numerics-matched reference: bf16 MXU operands, f32 accumulation,
    # f32 bias epilogue — mirrors the kernel.
    xc = x.astype(compute_dtype)
    wqt = wq.T.astype(compute_dtype)
    wkt = wk.T.astype(compute_dtype)
    q = jnp.einsum("bsh,ho->bso", xc, wqt,
                   preferred_element_type=jnp.float32) + bq
    k = jnp.einsum("bsh,ho->bso", xc, wkt,
                   preferred_element_type=jnp.float32) + bk
    q = q.astype(compute_dtype)
    k = k.astype(compute_dtype)
    return jnp.einsum("bso,bto->bst", q, k,
                      preferred_element_type=jnp.float32).astype(x.dtype)


if __name__ == "__main__":
    B, S, H = 2, 8, 32
    key = jax.random.PRNGKey(0)
    kx, kwq, kbq, kwk, kbk = jax.random.split(key, 5)

    x = jax.random.normal(kx, (B, S, H), dtype=jnp.float32)
    # Deterministic init mimicking nn.Linear's uniform(-1/sqrt(H), 1/sqrt(H))
    bound = 1.0 / (H ** 0.5)
    wq = jax.random.uniform(kwq, (H, H), jnp.float32, -bound, bound)
    bq = jax.random.uniform(kbq, (H,), jnp.float32, -bound, bound)
    wk = jax.random.uniform(kwk, (H, H), jnp.float32, -bound, bound)
    bk = jax.random.uniform(kbk, (H,), jnp.float32, -bound, bound)

    out = attention_matrix(x, wq, bq, wk, bk)
    out = jax.block_until_ready(out)
    assert out.shape == (B, S, S)

    # Tight check against a reference using the same bf16-operand / f32-accum numerics.
    ref_matched = attention_matrix_ref_matched(x, wq, bq, wk, bk)
    assert jnp.allclose(out, ref_matched, atol=2e-3, rtol=2e-3), \
        "mismatch vs numerics-matched reference"

    # Loose sanity check against the exact f32 module semantics (bf16 rounding slack).
    ref_f32 = attention_matrix_ref(x, wq, bq, wk, bk)
    assert jnp.allclose(out, ref_f32, atol=5e-1, rtol=1e-1), \
        "mismatch vs f32 module reference"

    print("KERNEL_OK")
</pallas_src>

<mosaic_0001>
module attributes {stable_mosaic.version = 11 : i64} {
  func.func @attention_matrix_kernel(%arg0: i32, %arg1: i32, %arg2: i32, %arg3: memref<1x8x32xbf16, #tpu.memory_space<vmem>>, %arg4: memref<1x8x32xbf16, #tpu.memory_space<vmem>>, %arg5: memref<32x32xbf16, #tpu.memory_space<vmem>>, %arg6: memref<1x32xf32, #tpu.memory_space<vmem>>, %arg7: memref<32x32xbf16, #tpu.memory_space<vmem>>, %arg8: memref<1x32xf32, #tpu.memory_space<vmem>>, %arg9: memref<1x8x8xf32, #tpu.memory_space<vmem>>, %arg10: memref<8x32xbf16, #tpu.memory_space<vmem>>) attributes {dimension_semantics = [#tpu.dimension_semantics<parallel>, #tpu.dimension_semantics<parallel>, #tpu.dimension_semantics<arbitrary>], iteration_bounds = array<i64: 2, 1, 1>, scalar_prefetch = 0 : i64, scratch_operands = 1 : i64, tpu.core_type = #tpu.core_type<tc>, window_params = [{transform_indices = @transform_0, window_bounds = array<i64: 1, 8, 32>}, {transform_indices = @transform_1, window_bounds = array<i64: 1, 8, 32>}, {pipeline_mode = #tpu.pipeline_mode<synchronous>, transform_indices = @transform_2, window_bounds = array<i64: 32, 32>}, {pipeline_mode = #tpu.pipeline_mode<synchronous>, transform_indices = @transform_3, window_bounds = array<i64: 1, 32>}, {pipeline_mode = #tpu.pipeline_mode<synchronous>, transform_indices = @transform_4, window_bounds = array<i64: 32, 32>}, {pipeline_mode = #tpu.pipeline_mode<synchronous>, transform_indices = @transform_5, window_bounds = array<i64: 1, 32>}, {transform_indices = @transform_6, window_bounds = array<i64: 1, 8, 8>}]} {
    %c0_i32 = arith.constant 0 : i32
    %0 = arith.cmpi eq, %arg2, %c0_i32 : i32
    %1 = arith.extui %0 : i1 to i32
    %c0_i32_0 = arith.constant 0 : i32
    %2 = arith.cmpi ne, %1, %c0_i32_0 : i32
    scf.if %2 {
      %c0_13 = arith.constant 0 : index
      %c0_14 = arith.constant 0 : index
      %c0_15 = arith.constant 0 : index
      %16 = vector.load %arg3[%c0_13, %c0_14, %c0_15] : memref<1x8x32xbf16, #tpu.memory_space<vmem>>, vector<1x8x32xbf16>
      %17 = vector.shape_cast %16 : vector<1x8x32xbf16> to vector<8x32xbf16>
      %c0_16 = arith.constant 0 : index
      %c0_17 = arith.constant 0 : index
      %18 = vector.load %arg5[%c0_16, %c0_17] : memref<32x32xbf16, #tpu.memory_space<vmem>>, vector<32x32xbf16>
      %cst_18 = arith.constant dense<0.000000e+00> : vector<8x32xf32>
      %19 = tpu.matmul %17, %18, %cst_18 {dimension_numbers = #tpu.dot_dimension_numbers<[1], [0], [0], [1], [0, 0, 1, 1], [], []>} : vector<8x32xbf16>, vector<32x32xbf16>, vector<8x32xf32> -> vector<8x32xf32>
      %c0_19 = arith.constant 0 : index
      %c0_20 = arith.constant 0 : index
      %20 = vector.load %arg6[%c0_19, %c0_20] : memref<1x32xf32, #tpu.memory_space<vmem>>, vector<1x32xf32>
      %21 = vector.broadcast %20 : vector<1x32xf32> to vector<8x32xf32>
      %22 = arith.addf %19, %21 : vector<8x32xf32>
      %23 = arith.truncf %22 : vector<8x32xf32> to vector<8x32xbf16>
      %c0_21 = arith.constant 0 : index
      %c0_22 = arith.constant 0 : index
      %24 = vector.load %arg10[%c0_21, %c0_22] : memref<8x32xbf16, #tpu.memory_space<vmem>>, vector<8x32xbf16>
      tpu.vector_store %arg10[%c0_21, %c0_22], %23 {strides = array<i32>} : memref<8x32xbf16, #tpu.memory_space<vmem>>, vector<8x32xbf16>,
    } else {
    }
    %c0 = arith.constant 0 : index
    %c0_1 = arith.constant 0 : index
    %c0_2 = arith.constant 0 : index
    %3 = vector.load %arg4[%c0, %c0_1, %c0_2] : memref<1x8x32xbf16, #tpu.memory_space<vmem>>, vector<1x8x32xbf16>
    %4 = vector.shape_cast %3 : vector<1x8x32xbf16> to vector<8x32xbf16>
    %c0_3 = arith.constant 0 : index
    %c0_4 = arith.constant 0 : index
    %5 = vector.load %arg7[%c0_3, %c0_4] : memref<32x32xbf16, #tpu.memory_space<vmem>>, vector<32x32xbf16>
    %cst = arith.constant dense<0.000000e+00> : vector<8x32xf32>
    %6 = tpu.matmul %4, %5, %cst {dimension_numbers = #tpu.dot_dimension_numbers<[1], [0], [0], [1], [0, 0, 1, 1], [], []>} : vector<8x32xbf16>, vector<32x32xbf16>, vector<8x32xf32> -> vector<8x32xf32>
    %c0_5 = arith.constant 0 : index
    %c0_6 = arith.constant 0 : index
    %7 = vector.load %arg8[%c0_5, %c0_6] : memref<1x32xf32, #tpu.memory_space<vmem>>, vector<1x32xf32>
    %8 = vector.broadcast %7 : vector<1x32xf32> to vector<8x32xf32>
    %9 = arith.addf %6, %8 : vector<8x32xf32>
    %c0_7 = arith.constant 0 : index
    %c0_8 = arith.constant 0 : index
    %10 = vector.load %arg10[%c0_7, %c0_8] : memref<8x32xbf16, #tpu.memory_space<vmem>>, vector<8x32xbf16>
    %11 = arith.truncf %9 : vector<8x32xf32> to vector<8x32xbf16>
    %cst_9 = arith.constant dense<0.000000e+00> : vector<8x8xf32>
    %12 = tpu.matmul %10, %11, %cst_9 {dimension_numbers = #tpu.dot_dimension_numbers<[1], [1], [0], [0], [0, 0, 1, 0], [], []>} : vector<8x32xbf16>, vector<8x32xbf16>, vector<8x8xf32> -> vector<8x8xf32>
    %c0_10 = arith.constant 0 : index
    %c0_11 = arith.constant 0 : index
    %c0_12 = arith.constant 0 : index
    %13 = vector.load %arg9[%c0_10, %c0_11, %c0_12] : memref<1x8x8xf32, #tpu.memory_space<vmem>>, vector<1x8x8xf32>
    %14 = vector.shape_cast %13 : vector<1x8x8xf32> to vector<8x8xf32>
    %15 = vector.shape_cast %12 : vector<8x8xf32> to vector<1x8x8xf32>
    tpu.vector_store %arg9[%c0_10, %c0_11, %c0_12], %15 {strides = array<i32>} : memref<1x8x8xf32, #tpu.memory_space<vmem>>, vector<1x8x8xf32>,
    return
  }
  func.func @transform_0(%arg0: i32, %arg1: i32, %arg2: i32) -> (i32, i32, i32) {
    %c0_i32 = arith.constant 0 : i32
    %c0_i32_0 = arith.constant 0 : i32
    return %arg0, %arg1, %c0_i32 : i32, i32, i32
  }
  func.func @transform_1(%arg0: i32, %arg1: i32, %arg2: i32) -> (i32, i32, i32) {
    %c0_i32 = arith.constant 0 : i32
    %c0_i32_0 = arith.constant 0 : i32
    return %arg0, %arg2, %c0_i32 : i32, i32, i32
  }
  func.func @transform_2(%arg0: i32, %arg1: i32, %arg2: i32) -> (i32, i32) {
    %c0_i32 = arith.constant 0 : i32
    %c0_i32_0 = arith.constant 0 : i32
    %c0_i32_1 = arith.constant 0 : i32
    return %c0_i32, %c0_i32_0 : i32, i32
  }
  func.func @transform_3(%arg0: i32, %arg1: i32, %arg2: i32) -> (i32, i32) {
    %c0_i32 = arith.constant 0 : i32
    %c0_i32_0 = arith.constant 0 : i32
    %c0_i32_1 = arith.constant 0 : i32
    return %c0_i32, %c0_i32_0 : i32, i32
  }
  func.func @transform_4(%arg0: i32, %arg1: i32, %arg2: i32) -> (i32, i32) {
    %c0_i32 = arith.constant 0 : i32
    %c0_i32_0 = arith.constant 0 : i32
    %c0_i32_1 = arith.constant 0 : i32
    return %c0_i32, %c0_i32_0 : i32, i32
  }
  func.func @transform_5(%arg0: i32, %arg1: i32, %arg2: i32) -> (i32, i32) {
    %c0_i32 = arith.constant 0 : i32
    %c0_i32_0 = arith.constant 0 : i32
    %c0_i32_1 = arith.constant 0 : i32
    return %c0_i32, %c0_i32_0 : i32, i32
  }
  func.func @transform_6(%arg0: i32, %arg1: i32, %arg2: i32) -> (i32, i32, i32) {
    %c0_i32 = arith.constant 0 : i32
    return %arg0, %arg1, %arg2 : i32, i32, i32
  }
}

</mosaic_0001>

<llo_original>
// kernel: tpu_custom_call.1
$region0: #{tpu_custom_call.1}
  #allocation0 [shape = 'u32[]', space=smem, size = 0x4, offset = 0x4, fixed_abs, tag = 'smem constant byte address 0x4 - core index']
  #allocation1 [shape = 'u32[144,128]{1,0:T(1,128)}', space=vmem, size = 0x12000, scoped, tag = 'internal scratch']
  #allocation2 [shape = 'bf16[8,32]{1,0:T(8,128)(2,1)}', space=vmem, size = 0x800, scoped, tag = 'scratch operand']
  %s0 = inlined_call_operand.hbm [shape: bf16[2,8,32], index: 0, kind: input, shape index: {}]
  %s1 = inlined_call_operand.hbm [shape: bf16[2,8,32], index: 1, kind: input, shape index: {}]
  %s2 = inlined_call_operand.hbm [shape: bf16[32,32], index: 2, kind: input, shape index: {}]
  %s3 = inlined_call_operand.vmem [shape: f32[1,32], index: 3, kind: input, shape index: {}]
  %s4 = inlined_call_operand.hbm [shape: bf16[32,32], index: 4, kind: input, shape index: {}]
  %s5 = inlined_call_operand.vmem [shape: f32[1,32], index: 5, kind: input, shape index: {}]
  %s6 = inlined_call_operand.hbm [shape: f32[2,8,8], index: 6, kind: output, shape index: {}]
  %s7 = sld [smem:[#allocation0]]
  $region77: #{tpu_custom_call.1} parent=0
    _
  %s9 = ssub.s32 1, %s7
  %s10 = scalar_select 0, %s9, %s7
  $region1: #{tpu_custom_call.1} parent=0
    #allocation3 [shape = 'u8[4096]{0}', space=vmem, size = 0x1000, scoped, tag = 'input window, operand 0']
    #allocation4 [shape = 's32[2]{0}', space=sflag, size = 0x8, scoped, tag = 'scoped memory for tpu_custom_call.1']
    #allocation5 [shape = 's32[2]{0}', space=sflag, size = 0x8, scoped, tag = 'scoped memory for tpu_custom_call.1']
    #allocation6 [shape = 'u8[4096]{0}', space=vmem, size = 0x1000, scoped, tag = 'input window, operand 1']
    #allocation7 [shape = 's32[2]{0}', space=sflag, size = 0x8, scoped, tag = 'scoped memory for tpu_custom_call.1']
    #allocation8 [shape = 'u8[8192]{0}', space=vmem, size = 0x2000, scoped, tag = 'input window, operand 2, single buffered']
    #allocation9 [shape = 'u8[8192]{0}', space=vmem, size = 0x2000, scoped, tag = 'input window, operand 4, single buffered']
    #allocation10 [shape = 's32[1]{0}', space=sflag, size = 0x4, scoped, tag = 'scoped memory for tpu_custom_call.1']
    #allocation11 [shape = 'u8[8192]{0}', space=vmem, size = 0x2000, scoped, tag = 'output window, operand 0']
    %11 = vsyncpa [#allocation4], 0
    %s12 = scalar_lea.sflag [#allocation4], 1
    %13 = vsyncpa %s12, 0
    %14 = vsyncpa [#allocation7], 0
    %s15 = scalar_lea.sflag [#allocation7], 1
    %16 = vsyncpa %s15, 0
    %17 = vsyncpa [#allocation10], 0
    %18 = vsyncpa [#allocation5], 0
    %s19 = scalar_lea.sflag [#allocation5], 1
    %20 = vsyncpa %s19, 0
    loop: start=0, step=1, limit=4
    $region2: #{tpu_custom_call.1} parent=1 // loop_pre_header
      _
    $region3: #{tpu_custom_call.1} parent=1 // loop_header
      %s22 = sphi 0, %s26
      %p23 = scmp.ge.s32.totalorder %s22, 4
      %s29 = sphi 0, %s48
      %s30 = sphi 0, %s44
      %s31 = sphi 0, %s40
      %s32 = sphi 0, %s29
      %s33 = sphi 0, %s30
      %s34 = sphi 0, %s31
      %s35 = sphi 0, %s32
      %s36 = sphi 0, %s33
      %s37 = sphi 0, %s34
      %s53 = sphi 0, %s55
      %s56 = sphi 0, %s53
      %s57 = sphi 0, %s56
      %s73 = sphi 0, %s57
      %s81 = sphi 0, %s83
      %s84 = sphi 0, %s81
      %s85 = sphi 0, %s84
      %s101 = sphi 0, %s85
      %s105 = sphi 0, %s105
      %s107 = sphi 0, %s105
      %s108 = sphi 0, %s107
      %s122 = sphi 0, %s108
      %s126 = sphi 0, %s126
      %s128 = sphi 0, %s126
      %s129 = sphi 0, %s128
      %s143 = sphi 0, %s129
      %s147 = sphi 0, %s147
      %s149 = sphi 0, %s147
      %s150 = sphi 0, %s149
      %s164 = sphi 0, %s150
      %s168 = sphi 0, %s168
      %s170 = sphi 0, %s168
      %s171 = sphi 0, %s170
      %s185 = sphi 0, %s171
      %s195 = sphi 0, %s197
      %s198 = sphi 0, %s195
      %s199 = sphi 0, %s198
      %s215 = sphi 0, %s199
    $region4: #{tpu_custom_call.1} parent=1 // loop_header_branch
      %25 = sbr.rel (%p23) target = $region8
    $region5: #{tpu_custom_call.1} parent=1 // loop_body
      %s27 = ssub.s32 %s22, 1
      %s28 = ssub.s32 %s22, 2
      %s38 = sadd.s32 1, %s31
      %p39 = scmp.ge.s32.totalorder %s38, 1
      %s40 = scalar_select %p39, 0, %s38
      %s41 = sadd.s32 1, %s30
      %s42 = scalar_select %p39, %s41, %s30
      %p43 = scmp.ge.s32.totalorder %s42, 1
      %s44 = scalar_select %p43, 0, %s42
      %s45 = sadd.s32 1, %s29
      %s46 = scalar_select %p43, %s45, %s29
      %p47 = scmp.ge.s32.totalorder %s46, 2
      %s48 = scalar_select %p47, 0, %s46
      %s49 = ssub.s32 %s29, %s48
      %s50 = ssub.s32 %s30, %s44
      %s51 = sor.u32 %s49, %s50
      %p52 = scmp.eq.s32.totalorder %s51, 0
      %s54 = sadd.s32 %s53, 1
      %s55 = scalar_select %p52, %s53, %s54
      %p58 = pneg %p52
      %p59 = scmp.eq.s32.totalorder %s22, 1
      %p60 = por %p58, %p59
      %p61 = scmp.ne.s32.totalorder %s53, %s56
      %p62 = scmp.eq.s32.totalorder %s22, 0
      %p63 = por %p61, %p62
      %p64 = scmp.ne.s32.totalorder %s53, %s56
      %p65 = scmp.eq.s32.totalorder %s27, 1
      %p66 = por %p64, %p65
      %p67 = scmp.ne.s32.totalorder %s56, %s57
      %p68 = scmp.eq.s32.totalorder %s27, 0
      %p69 = por %p67, %p68
      %p70 = scmp.ne.s32.totalorder %s56, %s57
      %p71 = scmp.eq.s32.totalorder %s28, 1
      %p72 = por %p70, %p71
      %p74 = scmp.ne.s32.totalorder %s57, %s73
      %p75 = scmp.eq.s32.totalorder %s28, 0
      %p76 = por %p74, %p75
      %s77 = ssub.s32 %s29, %s48
      %s78 = ssub.s32 %s31, %s40
      %s79 = sor.u32 %s77, %s78
      %p80 = scmp.eq.s32.totalorder %s79, 0
      %s82 = sadd.s32 %s81, 1
      %s83 = scalar_select %p80, %s81, %s82
      %p86 = pneg %p80
      %p87 = scmp.eq.s32.totalorder %s22, 1
      %p88 = por %p86, %p87
      %p89 = scmp.ne.s32.totalorder %s81, %s84
      %p90 = scmp.eq.s32.totalorder %s22, 0
      %p91 = por %p89, %p90
      %p92 = scmp.ne.s32.totalorder %s81, %s84
      %p93 = scmp.eq.s32.totalorder %s27, 1
      %p94 = por %p92, %p93
      %p95 = scmp.ne.s32.totalorder %s84, %s85
      %p96 = scmp.eq.s32.totalorder %s27, 0
      %p97 = por %p95, %p96
      %p98 = scmp.ne.s32.totalorder %s84, %s85
      %p99 = scmp.eq.s32.totalorder %s28, 1
      %p100 = por %p98, %p99
      %p102 = scmp.ne.s32.totalorder %s85, %s101
      %p103 = scmp.eq.s32.totalorder %s28, 0
      %p104 = por %p102, %p103
      %s106 = sadd.s32 %s105, 1
      %p109 = scmp.eq.s32.totalorder %s22, 1
      %p110 = scmp.ne.s32.totalorder %s105, %s107
      %p111 = scmp.eq.s32.totalorder %s22, 0
      %p112 = por %p110, %p111
      %p113 = scmp.ne.s32.totalorder %s105, %s107
      %p114 = scmp.eq.s32.totalorder %s27, 1
      %p115 = por %p113, %p114
      %p116 = scmp.ne.s32.totalorder %s107, %s108
      %p117 = scmp.eq.s32.totalorder %s27, 0
      %p118 = por %p116, %p117
      %p119 = scmp.ne.s32.totalorder %s107, %s108
      %p120 = scmp.eq.s32.totalorder %s28, 1
      %p121 = por %p119, %p120
      %p123 = scmp.ne.s32.totalorder %s108, %s122
      %p124 = scmp.eq.s32.totalorder %s28, 0
      %p125 = por %p123, %p124
      %s127 = sadd.s32 %s126, 1
      %p130 = scmp.eq.s32.totalorder %s22, 1
      %p131 = scmp.ne.s32.totalorder %s126, %s128
      %p132 = scmp.eq.s32.totalorder %s22, 0
      %p133 = por %p131, %p132
      %p134 = scmp.ne.s32.totalorder %s126, %s128
      %p135 = scmp.eq.s32.totalorder %s27, 1
      %p136 = por %p134, %p135
      %p137 = scmp.ne.s32.totalorder %s128, %s129
      %p138 = scmp.eq.s32.totalorder %s27, 0
      %p139 = por %p137, %p138
      %p140 = scmp.ne.s32.totalorder %s128, %s129
      %p141 = scmp.eq.s32.totalorder %s28, 1
      %p142 = por %p140, %p141
      %p144 = scmp.ne.s32.totalorder %s129, %s143
      %p145 = scmp.eq.s32.totalorder %s28, 0
      %p146 = por %p144, %p145
      %s148 = sadd.s32 %s147, 1
      %p151 = scmp.eq.s32.totalorder %s22, 1
      %p152 = scmp.ne.s32.totalorder %s147, %s149
      %p153 = scmp.eq.s32.totalorder %s22, 0
      %p154 = por %p152, %p153
      %p155 = scmp.ne.s32.totalorder %s147, %s149
      %p156 = scmp.eq.s32.totalorder %s27, 1
      %p157 = por %p155, %p156
      %p158 = scmp.ne.s32.totalorder %s149, %s150
      %p159 = scmp.eq.s32.totalorder %s27, 0
      %p160 = por %p158, %p159
      %p161 = scmp.ne.s32.totalorder %s149, %s150
      %p162 = scmp.eq.s32.totalorder %s28, 1
      %p163 = por %p161, %p162
      %p165 = scmp.ne.s32.totalorder %s150, %s164
      %p166 = scmp.eq.s32.totalorder %s28, 0
      %p167 = por %p165, %p166
      %s169 = sadd.s32 %s168, 1
      %p172 = scmp.eq.s32.totalorder %s22, 1
      %p173 = scmp.ne.s32.totalorder %s168, %s170
      %p174 = scmp.eq.s32.totalorder %s22, 0
      %p175 = por %p173, %p174
      %p176 = scmp.ne.s32.totalorder %s168, %s170
      %p177 = scmp.eq.s32.totalorder %s27, 1
      %p178 = por %p176, %p177
      %p179 = scmp.ne.s32.totalorder %s170, %s171
      %p180 = scmp.eq.s32.totalorder %s27, 0
      %p181 = por %p179, %p180
      %p182 = scmp.ne.s32.totalorder %s170, %s171
      %p183 = scmp.eq.s32.totalorder %s28, 1
      %p184 = por %p182, %p183
      %p186 = scmp.ne.s32.totalorder %s171, %s185
      %p187 = scmp.eq.s32.totalorder %s28, 0
      %p188 = por %p186, %p187
      %s189 = ssub.s32 %s29, %s48
      %s190 = ssub.s32 %s30, %s44
      %s191 = sor.u32 %s189, %s190
      %s192 = ssub.s32 %s31, %s40
      %s193 = sor.u32 %s191, %s192
      %p194 = scmp.eq.s32.totalorder %s193, 0
      %s196 = sadd.s32 %s195, 1
      %s197 = scalar_select %p194, %s195, %s196
      %p200 = pneg %p194
      %p201 = scmp.eq.s32.totalorder %s22, 1
      %p202 = por %p200, %p201
      %p203 = scmp.ne.s32.totalorder %s195, %s198
      %p204 = scmp.eq.s32.totalorder %s22, 0
      %p205 = por %p203, %p204
      %p206 = scmp.ne.s32.totalorder %s195, %s198
      %p207 = scmp.eq.s32.totalorder %s27, 1
      %p208 = por %p206, %p207
      %p209 = scmp.ne.s32.totalorder %s198, %s199
      %p210 = scmp.eq.s32.totalorder %s27, 0
      %p211 = por %p209, %p210
      %p212 = scmp.ne.s32.totalorder %s198, %s199
      %p213 = scmp.eq.s32.totalorder %s28, 1
      %p214 = por %p212, %p213
      %p216 = scmp.ne.s32.totalorder %s199, %s215
      %p217 = scmp.eq.s32.totalorder %s28, 0
      %p218 = por %p216, %p217
      %p219 = scmp.le.s32.totalorder 1, %s22
      %p220 = scmp.lt.s32.totalorder %s22, 3
      %p221 = pnand %p219, %p220
      %p222 = pneg %p221
      // Predicated region
      $region9: #{tpu_custom_call.1} parent=5 // pred_check
        _
      $region10: #{tpu_custom_call.1} parent=5 // pred_check_branch
        %224 = sbr.rel (%p221) target = $region12
      $region11: #{tpu_custom_call.1} parent=5 // pred_region
        %s225 = ssub.s32 %s22, 1
        // Predicated region
        $region13: #{tpu_custom_call.1} parent=11 // pred_check
          %p226 = pneg %p118
        $region14: #{tpu_custom_call.1} parent=11 // pred_check_branch
          %228 = sbr.rel (%p226) target = $region16
        $region15: #{tpu_custom_call.1} parent=11 // pred_region
          %s230 = ssub.s32 256, 256
          %231 = vsyncadd [#allocation7], %s230
          %s232 = sshll.u32 [#allocation8], 4
          %s233 = int_to_ptr.vmem [resolvable:$true] %s232
          %238 = dma.hbm_to_vmem [thread:$0]  %s2, 256, %s233, [#allocation7], 64, 64, 4
        $region16: #{tpu_custom_call.1} parent=11 // pred_fallthru
          _
        // Predicated region
        $region17: #{tpu_custom_call.1} parent=11 // pred_check
          %p239 = pneg %p139
        $region18: #{tpu_custom_call.1} parent=11 // pred_check_branch
          %241 = sbr.rel (%p239) target = $region20
        $region19: #{tpu_custom_call.1} parent=11 // pred_region
          _
        $region20: #{tpu_custom_call.1} parent=11 // pred_fallthru
          _
        // Predicated region
        $region21: #{tpu_custom_call.1} parent=11 // pred_check
          %p242 = pneg %p160
        $region22: #{tpu_custom_call.1} parent=11 // pred_check_branch
          %244 = sbr.rel (%p242) target = $region24
        $region23: #{tpu_custom_call.1} parent=11 // pred_region
          %s246 = ssub.s32 256, 256
          %247 = vsyncadd [#allocation10], %s246
          %s248 = sshll.u32 [#allocation9], 4
          %s249 = int_to_ptr.vmem [resolvable:$true] %s248
          %254 = dma.hbm_to_vmem [thread:$0]  %s4, 256, %s249, [#allocation10], 64, 64, 4
        $region24: #{tpu_custom_call.1} parent=11 // pred_fallthru
          _
        // Predicated region
        $region25: #{tpu_custom_call.1} parent=11 // pred_check
          %p255 = pneg %p181
        $region26: #{tpu_custom_call.1} parent=11 // pred_check_branch
          %257 = sbr.rel (%p255) target = $region28
        $region27: #{tpu_custom_call.1} parent=11 // pred_region
          _
        $region28: #{tpu_custom_call.1} parent=11 // pred_fallthru
          _
      $region12: #{tpu_custom_call.1} parent=5 // pred_fallthru
        _
      %p258 = scmp.lt.s32.totalorder %s22, 2
      // Predicated region
      $region29: #{tpu_custom_call.1} parent=5 // pred_check
        %p259 = pneg %p258
      $region30: #{tpu_custom_call.1} parent=5 // pred_check_branch
        %261 = sbr.rel (%p259) target = $region32
      $region31: #{tpu_custom_call.1} parent=5 // pred_region
        // Predicated region
        $region33: #{tpu_custom_call.1} parent=31 // pred_check
          %p262 = pneg %p63
        $region34: #{tpu_custom_call.1} parent=31 // pred_check_branch
          %264 = sbr.rel (%p262) target = $region36
        $region35: #{tpu_custom_call.1} parent=31 // pred_region
          %s265 = sand.u32 %s53, 1
          %s266 = scalar_lea.sflag [#allocation4], %s265
          %s267 = sand.u32 %s53, 1
          %s268 = smul.addr %s267, 4
          %s269 = scalar_lea.vmem [#allocation3], %s268
          %s271 = ssub.s32 64, 64
          %272 = vsyncadd %s266, %s271
          %s273 = sadd.s32 %s30, %s29
          %s274 = smul.addr %s273, 64
          %s275 = scalar_lea.hbm %s0, %s274
          %s277 = sshll.u32 %s269, 4
          %s278 = int_to_ptr.vmem [resolvable:$true] %s277
          %280 = dma.hbm_to_vmem [thread:$0]  %s275, 64, %s278, %s266
        $region36: #{tpu_custom_call.1} parent=31 // pred_fallthru
          _
        // Predicated region
        $region37: #{tpu_custom_call.1} parent=31 // pred_check
          %p281 = pneg %p91
        $region38: #{tpu_custom_call.1} parent=31 // pred_check_branch
          %283 = sbr.rel (%p281) target = $region40
        $region39: #{tpu_custom_call.1} parent=31 // pred_region
          %s284 = sand.u32 %s22, 1
          %s285 = scalar_lea.sflag [#allocation7], %s284
          %s286 = sand.u32 %s81, 1
          %s287 = smul.addr %s286, 4
          %s288 = scalar_lea.vmem [#allocation6], %s287
          %s290 = ssub.s32 64, 64
          %291 = vsyncadd %s285, %s290
          %s292 = sadd.s32 %s31, %s29
          %s293 = smul.addr %s292, 64
          %s294 = scalar_lea.hbm %s1, %s293
          %s296 = sshll.u32 %s288, 4
          %s297 = int_to_ptr.vmem [resolvable:$true] %s296
          %299 = dma.hbm_to_vmem [thread:$0]  %s294, 64, %s297, %s285
        $region40: #{tpu_custom_call.1} parent=31 // pred_fallthru
          _
      $region32: #{tpu_custom_call.1} parent=5 // pred_fallthru
        _
      %p300 = scmp.le.s32.totalorder 1, %s22
      %p301 = scmp.lt.s32.totalorder %s22, 3
      %p302 = pnand %p300, %p301
      %p303 = pneg %p302
      // Predicated region
      $region41: #{tpu_custom_call.1} parent=5 // pred_check
        _
      $region42: #{tpu_custom_call.1} parent=5 // pred_check_branch
        %305 = sbr.rel (%p302) target = $region44
      $region43: #{tpu_custom_call.1} parent=5 // pred_region
        %s306 = ssub.s32 %s22, 1
        %s307 = sand.u32 %s56, 1
        %s308 = scalar_lea.sflag [#allocation4], %s307
        %s309 = sand.u32 %s56, 1
        %s310 = smul.addr %s309, 4
        %s311 = scalar_lea.vmem [#allocation3], %s310
        // Predicated region
        $region45: #{tpu_custom_call.1} parent=43 // pred_check
          %p312 = pneg %p69
        $region46: #{tpu_custom_call.1} parent=43 // pred_check_branch
          %314 = sbr.rel (%p312) target = $region48
        $region47: #{tpu_custom_call.1} parent=43 // pred_region
          %315 = dma.done %s308, 64
        $region48: #{tpu_custom_call.1} parent=43 // pred_fallthru
          _
        %s316 = sand.u32 %s27, 1
        %s317 = scalar_lea.sflag [#allocation7], %s316
        %s318 = sand.u32 %s84, 1
        %s319 = smul.addr %s318, 4
        %s320 = scalar_lea.vmem [#allocation6], %s319
        // Predicated region
        $region49: #{tpu_custom_call.1} parent=43 // pred_check
          %p321 = pneg %p97
        $region50: #{tpu_custom_call.1} parent=43 // pred_check_branch
          %323 = sbr.rel (%p321) target = $region52
        $region51: #{tpu_custom_call.1} parent=43 // pred_region
          %324 = dma.done %s317, 64
        $region52: #{tpu_custom_call.1} parent=43 // pred_fallthru
          _
        // Predicated region
        $region53: #{tpu_custom_call.1} parent=43 // pred_check
          %p325 = pneg %p118
        $region54: #{tpu_custom_call.1} parent=43 // pred_check_branch
          %327 = sbr.rel (%p325) target = $region56
        $region55: #{tpu_custom_call.1} parent=43 // pred_region
          %328 = dma.done [#allocation7], 256
        $region56: #{tpu_custom_call.1} parent=43 // pred_fallthru
          _
        // Predicated region
        $region57: #{tpu_custom_call.1} parent=43 // pred_check
          %p329 = pneg %p160
        $region58: #{tpu_custom_call.1} parent=43 // pred_check_branch
          %331 = sbr.rel (%p329) target = $region60
        $region59: #{tpu_custom_call.1} parent=43 // pred_region
          %332 = dma.done [#allocation10], 256
        $region60: #{tpu_custom_call.1} parent=43 // pred_fallthru
          _
        %s333 = sand.u32 %s56, 1
        %s334 = scalar_lea.sflag [#allocation4], %s333
        %s335 = sand.u32 %s56, 1
        %s336 = smul.addr %s335, 4
        %s337 = scalar_lea.vmem [#allocation3], %s336
        %p338 = pneg %p69
        %p339 = pneg %p66
        %s340 = sand.u32 %s27, 1
        %s341 = scalar_lea.sflag [#allocation7], %s340
        %s342 = sand.u32 %s84, 1
        %s343 = smul.addr %s342, 4
        %s344 = scalar_lea.vmem [#allocation6], %s343
        %p345 = pneg %p97
        %p346 = pneg %p94
        %p347 = pneg %p118
        %p348 = pneg %p115
        %p349 = pneg %p139
        %p350 = pneg %p136
        %p351 = pneg %p160
        %p352 = pneg %p157
        %p353 = pneg %p181
        %p354 = pneg %p178
        %p355 = pneg %p211
        %p356 = pneg %p208
        %s357 = sand.u32 %s198, 1
        %s358 = scalar_lea.sflag [#allocation5], %s357
        %s359 = sand.u32 %s198, 1
        %s360 = smul.addr %s359, 8
        %s361 = scalar_lea.vmem [#allocation11], %s360
        %p363 = scmp.eq.s32.totalorder %s34, 0
        // Predicated region
        $region61: #{tpu_custom_call.1} parent=43 // pred_check
          %p364 = pneg %p363
        $region62: #{tpu_custom_call.1} parent=43 // pred_check_branch
          %366 = sbr.rel (%p364) target = $region64
        $region63: #{tpu_custom_call.1} parent=43 // pred_region
          %v367 = vld [vmem:[%s311] sm:$0xf]
          %v368 = vld [vmem:[#allocation8] sm:$0xf]
          %v369 = vld [vmem:[#allocation8 + $0x4] sm:$0xf]
          %v370 = vld [vmem:[#allocation8 + $0x8] sm:$0xf]
          %v371 = vld [vmem:[#allocation8 + $0xc] sm:$0xf]
          %v372 = vld [vmem:[%s3] sm:$0x1]
          %v374 = vlaneseq
          %v375 = vshrl.u32 %v374, 7
          %v376 = vsub.s32 0, %v375
          %v377 = vrot.slane %v372, %v376
          %v383 = vunpack.c.l.b16 %v368
          %v384 = vunpack.c.l.b16 %v369
          %v385 = vunpack.c.l.b16 %v370
          %v386 = vunpack.c.l.b16 %v371
          %v387 = vpack.c.b16 %v384, %v383
          %v388 = vpack.c.b16 %v386, %v385
          %vm391 = vcmask 261120
          %v393 = vsel %vm391, %v367, 0
          %395 = vmatprep.subr.bf16.mxu0 0
          %396 = vmatpush1.bf16.msra.mxu0 %v387
          %397 = vmatprep.subr.bf16.mxu0 0
          %398 = vmatpush1.bf16.msra.mxu0 %v388
          %399 = vmatprep.subr.bf16.mxu0 0
          %400 = vmatpush1.bf16.msra.mxu0 0
          %401 = vmatprep.subr.bf16.mxu0 0
          %402 = vmatpush1.bf16.msra.mxu0 0
          %403 = vmatprep.subr.bf16.mxu0 0
          %404 = vmatpush1.bf16.msra.mxu0 0
          %405 = vmatprep.subr.bf16.mxu0 0
          %406 = vmatpush1.bf16.msra.mxu0 0
          %407 = vmatprep.subr.bf16.mxu0 0
          %408 = vmatpush1.bf16.msra.mxu0 0
          %409 = vmatprep.subr.bf16.mxu0 0
          %410 = vmatpush1.bf16.msra.mxu0 0
          %411 = vmatprep.subr.bf16.mxu0 0
          %412 = vmatpush1.bf16.msra.mxu0 0
          %413 = vmatprep.subr.bf16.mxu0 0
          %414 = vmatpush1.bf16.msra.mxu0 0
          %415 = vmatprep.subr.bf16.mxu0 0
          %416 = vmatpush1.bf16.msra.mxu0 0
          %417 = vmatprep.subr.bf16.mxu0 0
          %418 = vmatpush1.bf16.msra.mxu0 0
          %419 = vmatprep.subr.bf16.mxu0 0
          %420 = vmatpush1.bf16.msra.mxu0 0
          %421 = vmatprep.subr.bf16.mxu0 0
          %422 = vmatpush1.bf16.msra.mxu0 0
          %423 = vmatprep.subr.bf16.mxu0 0
          %424 = vmatpush1.bf16.msra.mxu0 0
          %425 = vmatprep.subr.bf16.mxu0 0
          %426 = vmatpush1.bf16.msra.mxu0 0
          %427 = vmatprep.mubr.bf16.mxu0 0
          %428 = vmatmul.mubr.bf16.gmra.mrb[0].mxu0 %v393
          %v429 = vpop.f32.mrb[0].mxu0
          %v430 = vadd.f32 %v377, %v429
          %v431 = vpop.f32.mrb[0].mxu0
          %v432 = vpop.f32.mrb[0].mxu0
          %v433 = vpop.f32.mrb[0].mxu0
          %434 = vdwg.mxu0
          %v435 = vpack.c.bf16 %v430, %v430
          %vm436 = vcmask 257024
          %437 = vst.msk [vmem:[#allocation2] sm:$0xf] %vm436, %v435
        $region64: #{tpu_custom_call.1} parent=43 // pred_fallthru
          _
        %v438 = vld [vmem:[%s320] sm:$0xf]
        %v439 = vld [vmem:[#allocation9] sm:$0xf]
        %v440 = vld [vmem:[#allocation9 + $0x4] sm:$0xf]
        %v441 = vld [vmem:[#allocation9 + $0x8] sm:$0xf]
        %v442 = vld [vmem:[#allocation9 + $0xc] sm:$0xf]
        %v443 = vld [vmem:[%s5] sm:$0x1]
        %v445 = vlaneseq
        %v446 = vshrl.u32 %v445, 7
        %v447 = vsub.s32 0, %v446
        %v448 = vrot.slane %v443, %v447
        %v454 = vunpack.c.l.b16 %v439
        %v455 = vunpack.c.l.b16 %v440
        %v456 = vunpack.c.l.b16 %v441
        %v457 = vunpack.c.l.b16 %v442
        %v458 = vpack.c.b16 %v455, %v454
        %v459 = vpack.c.b16 %v457, %v456
        %vm462 = vcmask 261120
        %v464 = vsel %vm462, %v438, 0
        %466 = vmatprep.subr.bf16.mxu0 0
        %467 = vmatpush1.bf16.msra.mxu0 %v458
        %468 = vmatprep.subr.bf16.mxu0 0
        %469 = vmatpush1.bf16.msra.mxu0 %v459
        %470 = vmatprep.subr.bf16.mxu0 0
        %471 = vmatpush1.bf16.msra.mxu0 0
        %472 = vmatprep.subr.bf16.mxu0 0
        %473 = vmatpush1.bf16.msra.mxu0 0
        %474 = vmatprep.subr.bf16.mxu0 0
        %475 = vmatpush1.bf16.msra.mxu0 0
        %476 = vmatprep.subr.bf16.mxu0 0
        %477 = vmatpush1.bf16.msra.mxu0 0
        %478 = vmatprep.subr.bf16.mxu0 0
        %479 = vmatpush1.bf16.msra.mxu0 0
        %480 = vmatprep.subr.bf16.mxu0 0
        %481 = vmatpush1.bf16.msra.mxu0 0
        %482 = vmatprep.subr.bf16.mxu0 0
        %483 = vmatpush1.bf16.msra.mxu0 0
        %484 = vmatprep.subr.bf16.mxu0 0
        %485 = vmatpush1.bf16.msra.mxu0 0
        %486 = vmatprep.subr.bf16.mxu0 0
        %487 = vmatpush1.bf16.msra.mxu0 0
        %488 = vmatprep.subr.bf16.mxu0 0
        %489 = vmatpush1.bf16.msra.mxu0 0
        %490 = vmatprep.subr.bf16.mxu0 0
        %491 = vmatpush1.bf16.msra.mxu0 0
        %492 = vmatprep.subr.bf16.mxu0 0
        %493 = vmatpush1.bf16.msra.mxu0 0
        %494 = vmatprep.subr.bf16.mxu0 0
        %495 = vmatpush1.bf16.msra.mxu0 0
        %496 = vmatprep.subr.bf16.mxu0 0
        %497 = vmatpush1.bf16.msra.mxu0 0
        %498 = vmatprep.mubr.bf16.mxu0 0
        %499 = vmatmul.mubr.bf16.gmra.mrb[0].mxu0 %v464
        %v500 = vpop.f32.mrb[0].mxu0
        %v501 = vadd.f32 %v448, %v500
        %v502 = vpop.f32.mrb[0].mxu0
        %v503 = vpop.f32.mrb[0].mxu0
        %v504 = vpop.f32.mrb[0].mxu0
        %505 = vdwg.mxu0
        %v506 = vld [vmem:[#allocation2] sm:$0xf]
        %v507 = vpack.c.bf16 %v501, %v501
        %v509 = vsel %vm462, %v506, 0
        %v512 = vsel %vm462, %v507, 0
        %514 = vmatprep.subr.bf16.mxu0 0
        %515 = vmatpush1.bf16.xpose.msra.mxu0 %v512
        %516 = vmatprep.subr.bf16.mxu0 0
        %517 = vmatpush1.bf16.xpose.msra.mxu0 0
        %518 = vmatprep.subr.bf16.mxu0 0
        %519 = vmatpush1.bf16.xpose.msra.mxu0 0
        %520 = vmatprep.subr.bf16.mxu0 0
        %521 = vmatpush1.bf16.xpose.msra.mxu0 0
        %522 = vmatprep.subr.bf16.mxu0 0
        %523 = vmatpush1.bf16.xpose.msra.mxu0 0
        %524 = vmatprep.subr.bf16.mxu0 0
        %525 = vmatpush1.bf16.xpose.msra.mxu0 0
        %526 = vmatprep.subr.bf16.mxu0 0
        %527 = vmatpush1.bf16.xpose.msra.mxu0 0
        %528 = vmatprep.subr.bf16.mxu0 0
        %529 = vmatpush1.bf16.xpose.msra.mxu0 0
        %530 = vmatprep.subr.bf16.mxu0 0
        %531 = vmatpush1.bf16.xpose.msra.mxu0 0
        %532 = vmatprep.subr.bf16.mxu0 0
        %533 = vmatpush1.bf16.xpose.msra.mxu0 0
        %534 = vmatprep.subr.bf16.mxu0 0
        %535 = vmatpush1.bf16.xpose.msra.mxu0 0
        %536 = vmatprep.subr.bf16.mxu0 0
        %537 = vmatpush1.bf16.xpose.msra.mxu0 0
        %538 = vmatprep.subr.bf16.mxu0 0
        %539 = vmatpush1.bf16.xpose.msra.mxu0 0
        %540 = vmatprep.subr.bf16.mxu0 0
        %541 = vmatpush1.bf16.xpose.msra.mxu0 0
        %542 = vmatprep.subr.bf16.mxu0 0
        %543 = vmatpush1.bf16.xpose.msra.mxu0 0
        %544 = vmatprep.subr.bf16.mxu0 0
        %545 = vmatpush1.bf16.xpose.msra.mxu0 0
        %546 = vmatprep.mubr.bf16.mxu0 0
        %547 = vmatmul.mubr.bf16.gmra.mrb[0].mxu0 %v509
        %v548 = vpop.f32.mrb[0].mxu0
        %v549 = vadd.f32 0.0, %v548
        %v550 = vpop.f32.mrb[0].mxu0
        %v551 = vpop.f32.mrb[0].mxu0
        %v552 = vpop.f32.mrb[0].mxu0
        %553 = vdwg.mxu0
        %vm554 = vcmask 64512
        %555 = vst.msk [vmem:[%s361] sm:$0xff] %vm554, %v549
        %s556 = sand.u32 %s198, 1
        %s557 = scalar_lea.sflag [#allocation5], %s556
        %s558 = sand.u32 %s198, 1
        %s559 = smul.addr %s558, 8
        %s560 = scalar_lea.vmem [#allocation11], %s559
        // Predicated region
        $region65: #{tpu_custom_call.1} parent=43 // pred_check
          %p561 = pneg %p208
        $region66: #{tpu_custom_call.1} parent=43 // pred_check_branch
          %563 = sbr.rel (%p561) target = $region68
        $region67: #{tpu_custom_call.1} parent=43 // pred_region
          %s565 = ssub.s32 128, 128
          %566 = vsyncadd %s557, %s565
          %s567 = sadd.s32 %s34, %s33
          %s568 = sadd.s32 %s567, %s32
          %s569 = smul.addr %s568, 128
          %s570 = scalar_lea.hbm %s6, %s569
          %s572 = sshll.u32 %s560, 4
          %s573 = int_to_ptr.vmem [resolvable:$true] %s572
          %575 = dma.vmem_to_hbm [thread:$0]  %s573, 128, %s570, %s557
        $region68: #{tpu_custom_call.1} parent=43 // pred_fallthru
          _
      $region44: #{tpu_custom_call.1} parent=5 // pred_fallthru
        _
      %p576 = scmp.le.s32.totalorder 2, %s22
      // Predicated region
      $region69: #{tpu_custom_call.1} parent=5 // pred_check
        %p577 = pneg %p576
      $region70: #{tpu_custom_call.1} parent=5 // pred_check_branch
        %579 = sbr.rel (%p577) target = $region72
      $region71: #{tpu_custom_call.1} parent=5 // pred_region
        %s580 = ssub.s32 %s22, 2
        // Predicated region
        $region73: #{tpu_custom_call.1} parent=71 // pred_check
          %p581 = pneg %p214
        $region74: #{tpu_custom_call.1} parent=71 // pred_check_branch
          %583 = sbr.rel (%p581) target = $region76
        $region75: #{tpu_custom_call.1} parent=71 // pred_region
          %s584 = sand.u32 %s199, 1
          %s585 = scalar_lea.sflag [#allocation5], %s584
          %s586 = sand.u32 %s199, 1
          %s587 = smul.addr %s586, 8
          %s588 = scalar_lea.vmem [#allocation11], %s587
          %589 = dma.done %s585, 128
        $region76: #{tpu_custom_call.1} parent=71 // pred_fallthru
          _
      $region72: #{tpu_custom_call.1} parent=5 // pred_fallthru
        _
    $region6: #{tpu_custom_call.1} parent=1 // loop_footer
      %s26 = sadd.s32 1, %s22
    $region7: #{tpu_custom_call.1} parent=1 // loop_footer_branch
      %21 = sbr.rel target = $region3
    $region8: #{tpu_custom_call.1} parent=1 // loop_exit
      _
    %590 = vsyncpa [#allocation4], 1
    %s591 = scalar_lea.sflag [#allocation4], 1
    %592 = vsyncpa %s591, 1
    %593 = vsyncpa [#allocation7], 1
    %s594 = scalar_lea.sflag [#allocation7], 1
    %595 = vsyncpa %s594, 1
    %596 = vsyncpa [#allocation10], 1
    %597 = vsyncpa [#allocation5], 1
    %s598 = scalar_lea.sflag [#allocation5], 1
    %599 = vsyncpa %s598, 1

</llo_original>
